<compile_context>
chip_gen: v7x
topology: tpu7x:2x2x1
jax: 0.10.0
libtpu: 0.0.40
codegen_flags: <defaults>
</compile_context>

<pallas_src>
import functools

import jax
import jax.numpy as jnp
from jax.experimental import pallas as pl
from jax.experimental.pallas import tpu as pltpu

TINY_POSITIVE = 1e-6
LANE = 128


def _round_up(x, m):
    return ((x + m - 1) // m) * m


def _actor_kernel(state_ref, w1_ref, b1_ref, w2_ref, b2_ref, wh_ref, bh_ref,
                  out_ref, *, max_action, action_dim):
    # fc1 + relu   (bf16 operands on the MXU, f32 accumulation & elementwise)
    x = state_ref[...].astype(jnp.bfloat16)
    h1 = jnp.dot(x, w1_ref[...], preferred_element_type=jnp.float32) + b1_ref[...]
    h1 = jnp.maximum(h1, 0.0)

    # fc2 + relu
    h2 = jnp.dot(h1.astype(jnp.bfloat16), w2_ref[...],
                 preferred_element_type=jnp.float32) + b2_ref[...]
    h2 = jnp.maximum(h2, 0.0)

    # Fused mu||sigma head: single MXU pass over h2, lane-padded to 128 so the
    # output store below is a single unmasked full-lane store.
    head = jnp.dot(h2.astype(jnp.bfloat16), wh_ref[...],
                   preferred_element_type=jnp.float32) + bh_ref[...]

    # mu path: tanh * max_action
    mu_vals = jnp.tanh(head) * max_action
    # sigma path: numerically-stable softplus + tiny, clamp to [tiny, 1.0]
    softplus = jnp.maximum(head, 0.0) + jnp.log1p(jnp.exp(-jnp.abs(head)))
    sigma_vals = jnp.clip(softplus + TINY_POSITIVE, TINY_POSITIVE, 1.0)

    # lanes [0, action_dim) -> mu, lanes [action_dim, 2*action_dim) -> sigma,
    # lanes beyond 2*action_dim are padding (sliced away in the wrapper).
    lane = jax.lax.broadcasted_iota(jnp.int32, head.shape, 1)
    out_ref[...] = jnp.where(lane < action_dim, mu_vals, sigma_vals)


def prepare_kernel_params(params):
    """Fuse the two heads into one weight/bias and cast matmul weights to
    bf16.  The fused head output dim is padded to a multiple of 128 lanes."""
    wmu, wsig = params["wmu"], params["wsig"]
    bmu, bsig = params["bmu"], params["bsig"]
    action_dim = wmu.shape[1]
    head_pad = _round_up(max(2 * action_dim, LANE), LANE)

    wh = jnp.concatenate([wmu, wsig], axis=1)
    wh = jnp.pad(wh, ((0, 0), (0, head_pad - 2 * action_dim)))
    bh = jnp.concatenate([bmu, bsig], axis=1)
    bh = jnp.pad(bh, ((0, 0), (0, head_pad - 2 * action_dim)))

    return dict(
        w1=params["w1"].astype(jnp.bfloat16), b1=params["b1"],
        w2=params["w2"].astype(jnp.bfloat16), b2=params["b2"],
        wh=wh.astype(jnp.bfloat16), bh=bh,
        action_dim=action_dim, head_pad=head_pad,
    )


def actor_forward(state, kparams, max_action, *, tile_b=512):
    """Run the ActorNetwork forward pass as a single batch-tiled Pallas kernel."""
    batch, state_dim = state.shape
    action_dim = kparams["action_dim"]
    head_pad = kparams["head_pad"]
    fc1_dim = kparams["w1"].shape[1]
    fc2_dim = kparams["w2"].shape[1]

    # Batch tiling: pad batch to a multiple of the tile (tile <= 512), then
    # run a 1-D parallel grid over batch tiles with the weights resident.
    padded_batch = _round_up(batch, 8)
    tile = min(tile_b, padded_batch)
    padded_batch = _round_up(padded_batch, tile)
    if padded_batch != batch:
        state = jnp.pad(state, ((0, padded_batch - batch), (0, 0)))
    grid = (padded_batch // tile,)

    def resident(shape):
        # Weights / biases: same block for every grid step (stay in VMEM).
        return pl.BlockSpec(shape, lambda i: (0, 0))

    flops = 2 * padded_batch * (state_dim * fc1_dim
                                + fc1_dim * fc2_dim
                                + fc2_dim * head_pad)
    transcendentals = 3 * padded_batch * head_pad  # tanh, exp, log1p
    bytes_accessed = (
        state.size * state.dtype.itemsize
        + sum(int(kparams[k].size) * kparams[k].dtype.itemsize
              for k in ("w1", "b1", "w2", "b2", "wh", "bh"))
        + padded_batch * head_pad * 4)

    kernel = functools.partial(_actor_kernel,
                               max_action=float(max_action),
                               action_dim=action_dim)

    out = pl.pallas_call(
        kernel,
        out_shape=jax.ShapeDtypeStruct((padded_batch, head_pad), jnp.float32),
        grid=grid,
        in_specs=[
            pl.BlockSpec((tile, state_dim), lambda i: (i, 0)),  # state tile
            resident((state_dim, fc1_dim)),
            resident((1, fc1_dim)),
            resident((fc1_dim, fc2_dim)),
            resident((1, fc2_dim)),
            resident((fc2_dim, head_pad)),
            resident((1, head_pad)),
        ],
        out_specs=pl.BlockSpec((tile, head_pad), lambda i: (i, 0)),
        compiler_params=pltpu.CompilerParams(
            dimension_semantics=("parallel",)),
        cost_estimate=pl.CostEstimate(
            flops=flops,
            transcendentals=transcendentals,
            bytes_accessed=bytes_accessed),
    )(
        state,
        kparams["w1"], kparams["b1"],
        kparams["w2"], kparams["b2"],
        kparams["wh"], kparams["bh"],
    )

    mu = out[:batch, :action_dim]
    sigma = out[:batch, action_dim:2 * action_dim]
    return mu, sigma


def init_params(key, state_dim, fc1_dim, fc2_dim, action_dim):
    """Deterministic parameter init (PyTorch-style uniform fan-in bound),
    weights stored as (in_features, out_features), f32 master copy."""
    ks = jax.random.split(key, 8)

    def lin(kw, kb, fan_in, fan_out):
        bound = 1.0 / jnp.sqrt(fan_in)
        w = jax.random.uniform(kw, (fan_in, fan_out), jnp.float32, -bound, bound)
        b = jax.random.uniform(kb, (1, fan_out), jnp.float32, -bound, bound)
        return w, b

    w1, b1 = lin(ks[0], ks[1], state_dim, fc1_dim)
    w2, b2 = lin(ks[2], ks[3], fc1_dim, fc2_dim)
    wmu, bmu = lin(ks[4], ks[5], fc2_dim, action_dim)
    wsig, bsig = lin(ks[6], ks[7], fc2_dim, action_dim)
    return dict(w1=w1, b1=b1, w2=w2, b2=b2,
                wmu=wmu, bmu=bmu, wsig=wsig, bsig=bsig)


def reference_forward(state, params, max_action):
    h1 = jax.nn.relu(state @ params["w1"] + params["b1"])
    h2 = jax.nn.relu(h1 @ params["w2"] + params["b2"])
    mu = jnp.tanh(h2 @ params["wmu"] + params["bmu"]) * max_action
    sg = jax.nn.softplus(h2 @ params["wsig"] + params["bsig"]) + TINY_POSITIVE
    sg = jnp.clip(sg, TINY_POSITIVE, 1.0)
    return mu, sg


if __name__ == "__main__":
    batch = 8
    state_dim = 16
    fc1_dim = 64
    fc2_dim = 64
    action_dim = 8
    max_action = 2.0

    key = jax.random.PRNGKey(0)
    k_state, k_params = jax.random.split(key)

    state = jax.random.normal(k_state, (batch, state_dim), jnp.float32)
    params = init_params(k_params, state_dim, fc1_dim, fc2_dim, action_dim)
    kparams = prepare_kernel_params(params)

    mu, sigma = actor_forward(state, kparams, max_action)
    jax.block_until_ready((mu, sigma))

    mu_ref, sigma_ref = reference_forward(state, params, max_action)
    # bf16 matmul operands vs. f32 reference -> loosened tolerance.
    assert mu.shape == (batch, action_dim) and sigma.shape == (batch, action_dim)
    assert jnp.allclose(mu, mu_ref, atol=5e-2, rtol=5e-2)
    assert jnp.allclose(sigma, sigma_ref, atol=5e-2, rtol=5e-2)

    print("KERNEL_OK")
</pallas_src>

<mosaic_0001>
module attributes {stable_mosaic.version = 11 : i64} {
  func.func @_actor_kernel(%arg0: i32, %arg1: memref<8x16xf32, #tpu.memory_space<vmem>>, %arg2: memref<16x64xbf16, #tpu.memory_space<vmem>>, %arg3: memref<1x64xf32, #tpu.memory_space<vmem>>, %arg4: memref<64x64xbf16, #tpu.memory_space<vmem>>, %arg5: memref<1x64xf32, #tpu.memory_space<vmem>>, %arg6: memref<64x128xbf16, #tpu.memory_space<vmem>>, %arg7: memref<1x128xf32, #tpu.memory_space<vmem>>, %arg8: memref<8x128xf32, #tpu.memory_space<vmem>>) attributes {dimension_semantics = [#tpu.dimension_semantics<parallel>], iteration_bounds = array<i64: 1>, scalar_prefetch = 0 : i64, scratch_operands = 0 : i64, tpu.core_type = #tpu.core_type<tc>, window_params = [{transform_indices = @transform_0, window_bounds = array<i64: 8, 16>}, {pipeline_mode = #tpu.pipeline_mode<synchronous>, transform_indices = @transform_1, window_bounds = array<i64: 16, 64>}, {pipeline_mode = #tpu.pipeline_mode<synchronous>, transform_indices = @transform_2, window_bounds = array<i64: 1, 64>}, {pipeline_mode = #tpu.pipeline_mode<synchronous>, transform_indices = @transform_3, window_bounds = array<i64: 64, 64>}, {pipeline_mode = #tpu.pipeline_mode<synchronous>, transform_indices = @transform_4, window_bounds = array<i64: 1, 64>}, {pipeline_mode = #tpu.pipeline_mode<synchronous>, transform_indices = @transform_5, window_bounds = array<i64: 64, 128>}, {pipeline_mode = #tpu.pipeline_mode<synchronous>, transform_indices = @transform_6, window_bounds = array<i64: 1, 128>}, {transform_indices = @transform_7, window_bounds = array<i64: 8, 128>}]} {
    %c0 = arith.constant 0 : index
    %c0_0 = arith.constant 0 : index
    %0 = vector.load %arg1[%c0, %c0_0] : memref<8x16xf32, #tpu.memory_space<vmem>>, vector<8x16xf32>
    %1 = arith.truncf %0 : vector<8x16xf32> to vector<8x16xbf16>
    %c0_1 = arith.constant 0 : index
    %c0_2 = arith.constant 0 : index
    %2 = vector.load %arg2[%c0_1, %c0_2] : memref<16x64xbf16, #tpu.memory_space<vmem>>, vector<16x64xbf16>
    %cst = arith.constant dense<0.000000e+00> : vector<8x64xf32>
    %3 = tpu.matmul %1, %2, %cst {dimension_numbers = #tpu.dot_dimension_numbers<[1], [0], [0], [1], [0, 0, 1, 1], [], []>} : vector<8x16xbf16>, vector<16x64xbf16>, vector<8x64xf32> -> vector<8x64xf32>
    %c0_3 = arith.constant 0 : index
    %c0_4 = arith.constant 0 : index
    %4 = vector.load %arg3[%c0_3, %c0_4] : memref<1x64xf32, #tpu.memory_space<vmem>>, vector<1x64xf32>
    %5 = vector.broadcast %4 : vector<1x64xf32> to vector<8x64xf32>
    %6 = arith.addf %3, %5 : vector<8x64xf32>
    %cst_5 = arith.constant 0.000000e+00 : f32
    %7 = vector.broadcast %cst_5 : f32 to vector<8x64xf32>
    %8 = arith.maximumf %6, %7 : vector<8x64xf32>
    %9 = arith.truncf %8 : vector<8x64xf32> to vector<8x64xbf16>
    %c0_6 = arith.constant 0 : index
    %c0_7 = arith.constant 0 : index
    %10 = vector.load %arg4[%c0_6, %c0_7] : memref<64x64xbf16, #tpu.memory_space<vmem>>, vector<64x64xbf16>
    %cst_8 = arith.constant dense<0.000000e+00> : vector<8x64xf32>
    %11 = tpu.matmul %9, %10, %cst_8 {dimension_numbers = #tpu.dot_dimension_numbers<[1], [0], [0], [1], [0, 0, 1, 1], [], []>} : vector<8x64xbf16>, vector<64x64xbf16>, vector<8x64xf32> -> vector<8x64xf32>
    %c0_9 = arith.constant 0 : index
    %c0_10 = arith.constant 0 : index
    %12 = vector.load %arg5[%c0_9, %c0_10] : memref<1x64xf32, #tpu.memory_space<vmem>>, vector<1x64xf32>
    %13 = vector.broadcast %12 : vector<1x64xf32> to vector<8x64xf32>
    %14 = arith.addf %11, %13 : vector<8x64xf32>
    %cst_11 = arith.constant 0.000000e+00 : f32
    %15 = vector.broadcast %cst_11 : f32 to vector<8x64xf32>
    %16 = arith.maximumf %14, %15 : vector<8x64xf32>
    %17 = arith.truncf %16 : vector<8x64xf32> to vector<8x64xbf16>
    %c0_12 = arith.constant 0 : index
    %c0_13 = arith.constant 0 : index
    %18 = vector.load %arg6[%c0_12, %c0_13] : memref<64x128xbf16, #tpu.memory_space<vmem>>, vector<64x128xbf16>
    %cst_14 = arith.constant dense<0.000000e+00> : vector<8x128xf32>
    %19 = tpu.matmul %17, %18, %cst_14 {dimension_numbers = #tpu.dot_dimension_numbers<[1], [0], [0], [1], [0, 0, 1, 1], [], []>} : vector<8x64xbf16>, vector<64x128xbf16>, vector<8x128xf32> -> vector<8x128xf32>
    %c0_15 = arith.constant 0 : index
    %c0_16 = arith.constant 0 : index
    %20 = vector.load %arg7[%c0_15, %c0_16] : memref<1x128xf32, #tpu.memory_space<vmem>>, vector<1x128xf32>
    %21 = vector.broadcast %20 : vector<1x128xf32> to vector<8x128xf32>
    %22 = arith.addf %19, %21 : vector<8x128xf32>
    %23 = math.tanh %22 : vector<8x128xf32>
    %cst_17 = arith.constant 2.000000e+00 : f32
    %24 = vector.broadcast %cst_17 : f32 to vector<8x128xf32>
    %25 = arith.mulf %23, %24 : vector<8x128xf32>
    %cst_18 = arith.constant 0.000000e+00 : f32
    %26 = vector.broadcast %cst_18 : f32 to vector<8x128xf32>
    %27 = arith.maximumf %22, %26 : vector<8x128xf32>
    %28 = math.absf %22 : vector<8x128xf32>
    %cst_19 = arith.constant 0.000000e+00 : f32
    %29 = vector.broadcast %cst_19 : f32 to vector<8x128xf32>
    %30 = arith.subf %29, %28 : vector<8x128xf32>
    %31 = math.exp %30 : vector<8x128xf32>
    %32 = math.log1p %31 : vector<8x128xf32>
    %33 = arith.addf %27, %32 : vector<8x128xf32>
    %cst_20 = arith.constant 9.99999997E-7 : f32
    %34 = vector.broadcast %cst_20 : f32 to vector<8x128xf32>
    %35 = arith.addf %33, %34 : vector<8x128xf32>
    %cst_21 = arith.constant 9.99999997E-7 : f32
    %cst_22 = arith.constant 1.000000e+00 : f32
    %36 = vector.broadcast %cst_21 : f32 to vector<8x128xf32>
    %37 = arith.maximumf %36, %35 : vector<8x128xf32>
    %38 = vector.broadcast %cst_22 : f32 to vector<8x128xf32>
    %39 = arith.minimumf %38, %37 : vector<8x128xf32>
    %40 = tpu.iota {dimensions = array<i32: 1>} : vector<8x128xi32>
    %c8_i32 = arith.constant 8 : i32
    %41 = vector.broadcast %c8_i32 : i32 to vector<8x128xi32>
    %42 = arith.cmpi slt, %40, %41 : vector<8x128xi32>
    %43 = arith.select %42, %25, %39 : vector<8x128xi1>, vector<8x128xf32>
    %c0_23 = arith.constant 0 : index
    %c0_24 = arith.constant 0 : index
    %44 = vector.load %arg8[%c0_23, %c0_24] : memref<8x128xf32, #tpu.memory_space<vmem>>, vector<8x128xf32>
    tpu.vector_store %arg8[%c0_23, %c0_24], %43 {strides = array<i32>} : memref<8x128xf32, #tpu.memory_space<vmem>>, vector<8x128xf32>,
    return
  }
  func.func @transform_0(%arg0: i32) -> (i32, i32) {
    %c0_i32 = arith.constant 0 : i32
    %c0_i32_0 = arith.constant 0 : i32
    return %arg0, %c0_i32 : i32, i32
  }
  func.func @transform_1(%arg0: i32) -> (i32, i32) {
    %c0_i32 = arith.constant 0 : i32
    %c0_i32_0 = arith.constant 0 : i32
    %c0_i32_1 = arith.constant 0 : i32
    return %c0_i32, %c0_i32_0 : i32, i32
  }
  func.func @transform_2(%arg0: i32) -> (i32, i32) {
    %c0_i32 = arith.constant 0 : i32
    %c0_i32_0 = arith.constant 0 : i32
    %c0_i32_1 = arith.constant 0 : i32
    return %c0_i32, %c0_i32_0 : i32, i32
  }
  func.func @transform_3(%arg0: i32) -> (i32, i32) {
    %c0_i32 = arith.constant 0 : i32
    %c0_i32_0 = arith.constant 0 : i32
    %c0_i32_1 = arith.constant 0 : i32
    return %c0_i32, %c0_i32_0 : i32, i32
  }
  func.func @transform_4(%arg0: i32) -> (i32, i32) {
    %c0_i32 = arith.constant 0 : i32
    %c0_i32_0 = arith.constant 0 : i32
    %c0_i32_1 = arith.constant 0 : i32
    return %c0_i32, %c0_i32_0 : i32, i32
  }
  func.func @transform_5(%arg0: i32) -> (i32, i32) {
    %c0_i32 = arith.constant 0 : i32
    %c0_i32_0 = arith.constant 0 : i32
    %c0_i32_1 = arith.constant 0 : i32
    return %c0_i32, %c0_i32_0 : i32, i32
  }
  func.func @transform_6(%arg0: i32) -> (i32, i32) {
    %c0_i32 = arith.constant 0 : i32
    %c0_i32_0 = arith.constant 0 : i32
    %c0_i32_1 = arith.constant 0 : i32
    return %c0_i32, %c0_i32_0 : i32, i32
  }
  func.func @transform_7(%arg0: i32) -> (i32, i32) {
    %c0_i32 = arith.constant 0 : i32
    %c0_i32_0 = arith.constant 0 : i32
    return %arg0, %c0_i32 : i32, i32
  }
}

</mosaic_0001>

<llo_original>
// kernel: tpu_custom_call.1
$region0: #{tpu_custom_call.1}
  #allocation0 [shape = 'u32[]', space=smem, size = 0x4, offset = 0x4, fixed_abs, tag = 'smem constant byte address 0x4 - core index']
  #allocation1 [shape = 'u32[144,128]{1,0:T(1,128)}', space=vmem, size = 0x12000, scoped, tag = 'internal scratch']
  %s0 = inlined_call_operand.hbm [shape: f32[8,16], index: 0, kind: input, shape index: {}]
  %s1 = inlined_call_operand.hbm [shape: bf16[16,64], index: 1, kind: input, shape index: {}]
  %s2 = inlined_call_operand.vmem [shape: f32[1,64], index: 2, kind: input, shape index: {}]
  %s3 = inlined_call_operand.hbm [shape: bf16[64,64], index: 3, kind: input, shape index: {}]
  %s4 = inlined_call_operand.vmem [shape: f32[1,64], index: 4, kind: input, shape index: {}]
  %s5 = inlined_call_operand.hbm [shape: bf16[64,128], index: 5, kind: input, shape index: {}]
  %s6 = inlined_call_operand.vmem [shape: f32[1,128], index: 6, kind: input, shape index: {}]
  %s7 = inlined_call_operand.hbm [shape: f32[8,128], index: 7, kind: output, shape index: {}]
  %s8 = sld [smem:[#allocation0]]
  $region54: #{tpu_custom_call.1} parent=0
    _
  %s10 = ssub.s32 1, %s8
  %s11 = scalar_select 0, %s10, %s8
  $region1: #{tpu_custom_call.1} parent=0
    #allocation2 [shape = 'u8[4096]{0}', space=vmem, size = 0x1000, scoped, tag = 'input window, operand 0, single buffered']
    #allocation3 [shape = 's32[1]{0}', space=sflag, size = 0x4, scoped, tag = 'scoped memory for tpu_custom_call.1']
    #allocation4 [shape = 's32[1]{0}', space=sflag, size = 0x4, scoped, tag = 'scoped memory for tpu_custom_call.1']
    #allocation5 [shape = 'u8[4096]{0}', space=vmem, size = 0x1000, scoped, tag = 'input window, operand 1, single buffered']
    #allocation6 [shape = 's32[1]{0}', space=sflag, size = 0x4, scoped, tag = 'scoped memory for tpu_custom_call.1']
    #allocation7 [shape = 'u8[16384]{0}', space=vmem, size = 0x4000, scoped, tag = 'input window, operand 3, single buffered']
    #allocation8 [shape = 'u8[16384]{0}', space=vmem, size = 0x4000, scoped, tag = 'input window, operand 5, single buffered']
    #allocation9 [shape = 's32[1]{0}', space=sflag, size = 0x4, scoped, tag = 'scoped memory for tpu_custom_call.1']
    #allocation10 [shape = 'u8[4096]{0}', space=vmem, size = 0x1000, scoped, tag = 'output window, operand 0, single buffered']
    %12 = vsyncpa [#allocation3], 0
    %13 = vsyncpa [#allocation6], 0
    %14 = vsyncpa [#allocation9], 0
    %15 = vsyncpa [#allocation4], 0
    // Predicated region
    $region2: #{tpu_custom_call.1} parent=1 // pred_check
      _
    $region3: #{tpu_custom_call.1} parent=1 // pred_check_branch
      %17 = sbr.rel (0) target = $region5
    $region4: #{tpu_custom_call.1} parent=1 // pred_region
      %s19 = ssub.s32 128, 128
      %20 = vsyncadd [#allocation3], %s19
      %s22 = sshll.u32 [#allocation2], 4
      %s23 = int_to_ptr.vmem [resolvable:$true] %s22
      %25 = dma.hbm_to_vmem [thread:$0]  %s0, 128, %s23, [#allocation3]
    $region5: #{tpu_custom_call.1} parent=1 // pred_fallthru
      _
    // Predicated region
    $region6: #{tpu_custom_call.1} parent=1 // pred_check
      _
    $region7: #{tpu_custom_call.1} parent=1 // pred_check_branch
      %27 = sbr.rel (0) target = $region9
    $region8: #{tpu_custom_call.1} parent=1 // pred_region
      %s29 = ssub.s32 128, 128
      %30 = vsyncadd [#allocation6], %s29
      %s31 = sshll.u32 [#allocation5], 4
      %s32 = int_to_ptr.vmem [resolvable:$true] %s31
      %37 = dma.hbm_to_vmem [thread:$0]  %s1, 128, %s32, [#allocation6], 64, 64, 4
    $region9: #{tpu_custom_call.1} parent=1 // pred_fallthru
      _
    // Predicated region
    $region10: #{tpu_custom_call.1} parent=1 // pred_check
      _
    $region11: #{tpu_custom_call.1} parent=1 // pred_check_branch
      %39 = sbr.rel (0) target = $region13
    $region12: #{tpu_custom_call.1} parent=1 // pred_region
      _
    $region13: #{tpu_custom_call.1} parent=1 // pred_fallthru
      _
    // Predicated region
    $region14: #{tpu_custom_call.1} parent=1 // pred_check
      _
    $region15: #{tpu_custom_call.1} parent=1 // pred_check_branch
      %41 = sbr.rel (0) target = $region17
    $region16: #{tpu_custom_call.1} parent=1 // pred_region
      %s43 = ssub.s32 512, 512
      %44 = vsyncadd [#allocation6], %s43
      %s45 = sshll.u32 [#allocation7], 4
      %s46 = int_to_ptr.vmem [resolvable:$true] %s45
      %51 = dma.hbm_to_vmem [thread:$0]  %s3, 512, %s46, [#allocation6], 64, 64, 4
    $region17: #{tpu_custom_call.1} parent=1 // pred_fallthru
      _
    // Predicated region
    $region18: #{tpu_custom_call.1} parent=1 // pred_check
      _
    $region19: #{tpu_custom_call.1} parent=1 // pred_check_branch
      %53 = sbr.rel (0) target = $region21
    $region20: #{tpu_custom_call.1} parent=1 // pred_region
      _
    $region21: #{tpu_custom_call.1} parent=1 // pred_fallthru
      _
    // Predicated region
    $region22: #{tpu_custom_call.1} parent=1 // pred_check
      _
    $region23: #{tpu_custom_call.1} parent=1 // pred_check_branch
      %55 = sbr.rel (0) target = $region25
    $region24: #{tpu_custom_call.1} parent=1 // pred_region
      %s57 = ssub.s32 512, 512
      %58 = vsyncadd [#allocation9], %s57
      %s59 = sshll.u32 [#allocation8], 4
      %s60 = int_to_ptr.vmem [resolvable:$true] %s59
      %65 = dma.hbm_to_vmem [thread:$0]  %s5, 512, %s60, [#allocation9], 64, 64, 4
    $region25: #{tpu_custom_call.1} parent=1 // pred_fallthru
      _
    // Predicated region
    $region26: #{tpu_custom_call.1} parent=1 // pred_check
      _
    $region27: #{tpu_custom_call.1} parent=1 // pred_check_branch
      %67 = sbr.rel (0) target = $region29
    $region28: #{tpu_custom_call.1} parent=1 // pred_region
      _
    $region29: #{tpu_custom_call.1} parent=1 // pred_fallthru
      _
    // Predicated region
    $region30: #{tpu_custom_call.1} parent=1 // pred_check
      _
    $region31: #{tpu_custom_call.1} parent=1 // pred_check_branch
      %69 = sbr.rel (0) target = $region33
    $region32: #{tpu_custom_call.1} parent=1 // pred_region
      %70 = dma.done [#allocation3], 128
    $region33: #{tpu_custom_call.1} parent=1 // pred_fallthru
      _
    // Predicated region
    $region34: #{tpu_custom_call.1} parent=1 // pred_check
      _
    $region35: #{tpu_custom_call.1} parent=1 // pred_check_branch
      %72 = sbr.rel (0) target = $region37
    $region36: #{tpu_custom_call.1} parent=1 // pred_region
      %73 = dma.done [#allocation6], 128
    $region37: #{tpu_custom_call.1} parent=1 // pred_fallthru
      _
    // Predicated region
    $region38: #{tpu_custom_call.1} parent=1 // pred_check
      _
    $region39: #{tpu_custom_call.1} parent=1 // pred_check_branch
      %75 = sbr.rel (0) target = $region41
    $region40: #{tpu_custom_call.1} parent=1 // pred_region
      %76 = dma.done [#allocation6], 512
    $region41: #{tpu_custom_call.1} parent=1 // pred_fallthru
      _
    // Predicated region
    $region42: #{tpu_custom_call.1} parent=1 // pred_check
      _
    $region43: #{tpu_custom_call.1} parent=1 // pred_check_branch
      %78 = sbr.rel (0) target = $region45
    $region44: #{tpu_custom_call.1} parent=1 // pred_region
      %79 = dma.done [#allocation9], 512
    $region45: #{tpu_custom_call.1} parent=1 // pred_fallthru
      _
    %v81 = vld [vmem:[#allocation2] sm:$0xff]
    %v82 = vpack.c.bf16 %v81, %v81
    %v83 = vld [vmem:[#allocation5] sm:$0xf]
    %v84 = vld [vmem:[#allocation5 + $0x4] sm:$0xf]
    %v85 = vld [vmem:[%s2] sm:$0x1]
    %v87 = vlaneseq
    %v88 = vshrl.u32 %v87, 7
    %v89 = vsub.s32 0, %v88
    %v90 = vrot.slane %v85, %v89
    %v94 = vunpack.c.l.b16 %v83
    %v95 = vunpack.c.l.b16 %v84
    %v96 = vpack.c.b16 %v95, %v94
    %vm98 = vcmask 130048
    %v100 = vsel %vm98, %v82, 0
    %102 = vmatprep.subr.bf16.mxu0 0
    %103 = vmatpush1.bf16.msra.mxu0 %v96
    %104 = vmatprep.subr.bf16.mxu0 0
    %105 = vmatpush1.bf16.msra.mxu0 0
    %106 = vmatprep.subr.bf16.mxu0 0
    %107 = vmatpush1.bf16.msra.mxu0 0
    %108 = vmatprep.subr.bf16.mxu0 0
    %109 = vmatpush1.bf16.msra.mxu0 0
    %110 = vmatprep.subr.bf16.mxu0 0
    %111 = vmatpush1.bf16.msra.mxu0 0
    %112 = vmatprep.subr.bf16.mxu0 0
    %113 = vmatpush1.bf16.msra.mxu0 0
    %114 = vmatprep.subr.bf16.mxu0 0
    %115 = vmatpush1.bf16.msra.mxu0 0
    %116 = vmatprep.subr.bf16.mxu0 0
    %117 = vmatpush1.bf16.msra.mxu0 0
    %118 = vmatprep.subr.bf16.mxu0 0
    %119 = vmatpush1.bf16.msra.mxu0 0
    %120 = vmatprep.subr.bf16.mxu0 0
    %121 = vmatpush1.bf16.msra.mxu0 0
    %122 = vmatprep.subr.bf16.mxu0 0
    %123 = vmatpush1.bf16.msra.mxu0 0
    %124 = vmatprep.subr.bf16.mxu0 0
    %125 = vmatpush1.bf16.msra.mxu0 0
    %126 = vmatprep.subr.bf16.mxu0 0
    %127 = vmatpush1.bf16.msra.mxu0 0
    %128 = vmatprep.subr.bf16.mxu0 0
    %129 = vmatpush1.bf16.msra.mxu0 0
    %130 = vmatprep.subr.bf16.mxu0 0
    %131 = vmatpush1.bf16.msra.mxu0 0
    %132 = vmatprep.subr.bf16.mxu0 0
    %133 = vmatpush1.bf16.msra.mxu0 0
    %134 = vmatprep.mubr.bf16.mxu0 0
    %135 = vmatmul.mubr.bf16.gmra.mrb[0].mxu0 %v100
    %v136 = vpop.f32.mrb[0].mxu0
    %v137 = vadd.f32 %v90, %v136
    %v138 = vpop.f32.mrb[0].mxu0
    %v139 = vpop.f32.mrb[0].mxu0
    %v140 = vpop.f32.mrb[0].mxu0
    %141 = vdwg.mxu0
    %v142 = vmax.f32 %v137, 0.0
    %v143 = vpack.c.bf16 %v142, %v142
    %v144 = vld [vmem:[#allocation7] sm:$0xf]
    %v145 = vld [vmem:[#allocation7 + $0x4] sm:$0xf]
    %v146 = vld [vmem:[#allocation7 + $0x8] sm:$0xf]
    %v147 = vld [vmem:[#allocation7 + $0xc] sm:$0xf]
    %v148 = vld [vmem:[#allocation7 + $0x10] sm:$0xf]
    %v149 = vld [vmem:[#allocation7 + $0x14] sm:$0xf]
    %v150 = vld [vmem:[#allocation7 + $0x18] sm:$0xf]
    %v151 = vld [vmem:[#allocation7 + $0x1c] sm:$0xf]
    %v152 = vld [vmem:[%s4] sm:$0x1]
    %v154 = vlaneseq
    %v155 = vshrl.u32 %v154, 7
    %v156 = vsub.s32 0, %v155
    %v157 = vrot.slane %v152, %v156
    %v167 = vunpack.c.l.b16 %v144
    %v168 = vunpack.c.l.b16 %v145
    %v169 = vunpack.c.l.b16 %v146
    %v170 = vunpack.c.l.b16 %v147
    %v171 = vunpack.c.l.b16 %v148
    %v172 = vunpack.c.l.b16 %v149
    %v173 = vunpack.c.l.b16 %v150
    %v174 = vunpack.c.l.b16 %v151
    %v175 = vpack.c.b16 %v168, %v167
    %v176 = vpack.c.b16 %v170, %v169
    %v177 = vpack.c.b16 %v172, %v171
    %v178 = vpack.c.b16 %v174, %v173
    %vm183 = vcmask 523264
    %v185 = vsel %vm183, %v143, 0
    %187 = vmatprep.subr.bf16.mxu0 0
    %188 = vmatpush1.bf16.msra.mxu0 %v175
    %189 = vmatprep.subr.bf16.mxu0 0
    %190 = vmatpush1.bf16.msra.mxu0 %v176
    %191 = vmatprep.subr.bf16.mxu0 0
    %192 = vmatpush1.bf16.msra.mxu0 %v177
    %193 = vmatprep.subr.bf16.mxu0 0
    %194 = vmatpush1.bf16.msra.mxu0 %v178
    %195 = vmatprep.subr.bf16.mxu0 0
    %196 = vmatpush1.bf16.msra.mxu0 0
    %197 = vmatprep.subr.bf16.mxu0 0
    %198 = vmatpush1.bf16.msra.mxu0 0
    %199 = vmatprep.subr.bf16.mxu0 0
    %200 = vmatpush1.bf16.msra.mxu0 0
    %201 = vmatprep.subr.bf16.mxu0 0
    %202 = vmatpush1.bf16.msra.mxu0 0
    %203 = vmatprep.subr.bf16.mxu0 0
    %204 = vmatpush1.bf16.msra.mxu0 0
    %205 = vmatprep.subr.bf16.mxu0 0
    %206 = vmatpush1.bf16.msra.mxu0 0
    %207 = vmatprep.subr.bf16.mxu0 0
    %208 = vmatpush1.bf16.msra.mxu0 0
    %209 = vmatprep.subr.bf16.mxu0 0
    %210 = vmatpush1.bf16.msra.mxu0 0
    %211 = vmatprep.subr.bf16.mxu0 0
    %212 = vmatpush1.bf16.msra.mxu0 0
    %213 = vmatprep.subr.bf16.mxu0 0
    %214 = vmatpush1.bf16.msra.mxu0 0
    %215 = vmatprep.subr.bf16.mxu0 0
    %216 = vmatpush1.bf16.msra.mxu0 0
    %217 = vmatprep.subr.bf16.mxu0 0
    %218 = vmatpush1.bf16.msra.mxu0 0
    %219 = vmatprep.mubr.bf16.mxu0 0
    %220 = vmatmul.mubr.bf16.gmra.mrb[0].mxu0 %v185
    %v221 = vpop.f32.mrb[0].mxu0
    %v222 = vadd.f32 %v157, %v221
    %v223 = vpop.f32.mrb[0].mxu0
    %v224 = vpop.f32.mrb[0].mxu0
    %v225 = vpop.f32.mrb[0].mxu0
    %226 = vdwg.mxu0
    %v227 = vmax.f32 %v222, 0.0
    %v228 = vpack.c.bf16 %v227, %v227
    %v229 = vld [vmem:[#allocation8] sm:$0xf]
    %v230 = vld [vmem:[#allocation8 + $0x4] sm:$0xf]
    %v231 = vld [vmem:[#allocation8 + $0x8] sm:$0xf]
    %v232 = vld [vmem:[#allocation8 + $0xc] sm:$0xf]
    %v233 = vld [vmem:[#allocation8 + $0x10] sm:$0xf]
    %v234 = vld [vmem:[#allocation8 + $0x14] sm:$0xf]
    %v235 = vld [vmem:[#allocation8 + $0x18] sm:$0xf]
    %v236 = vld [vmem:[#allocation8 + $0x1c] sm:$0xf]
    %v237 = vld [vmem:[%s6] sm:$0x1]
    %v239 = vlaneseq
    %v240 = vshrl.u32 %v239, 7
    %v241 = vsub.s32 0, %v240
    %v242 = vrot.slane %v237, %v241
    %v252 = vunpack.c.l.b16 %v229
    %v253 = vunpack.c.l.b16 %v230
    %v254 = vunpack.c.l.b16 %v231
    %v255 = vunpack.c.l.b16 %v232
    %v256 = vunpack.c.l.b16 %v233
    %v257 = vunpack.c.l.b16 %v234
    %v258 = vunpack.c.l.b16 %v235
    %v259 = vunpack.c.l.b16 %v236
    %v260 = vpack.c.b16 %v253, %v252
    %v261 = vpack.c.b16 %v255, %v254
    %v262 = vpack.c.b16 %v257, %v256
    %v263 = vpack.c.b16 %v259, %v258
    %v269 = vsel %vm183, %v228, 0
    %271 = vmatprep.subr.bf16.mxu0 0
    %272 = vmatpush1.bf16.msra.mxu0 %v260
    %273 = vmatprep.subr.bf16.mxu0 0
    %274 = vmatpush1.bf16.msra.mxu0 %v261
    %275 = vmatprep.subr.bf16.mxu0 0
    %276 = vmatpush1.bf16.msra.mxu0 %v262
    %277 = vmatprep.subr.bf16.mxu0 0
    %278 = vmatpush1.bf16.msra.mxu0 %v263
    %279 = vmatprep.subr.bf16.mxu0 0
    %280 = vmatpush1.bf16.msra.mxu0 0
    %281 = vmatprep.subr.bf16.mxu0 0
    %282 = vmatpush1.bf16.msra.mxu0 0
    %283 = vmatprep.subr.bf16.mxu0 0
    %284 = vmatpush1.bf16.msra.mxu0 0
    %285 = vmatprep.subr.bf16.mxu0 0
    %286 = vmatpush1.bf16.msra.mxu0 0
    %287 = vmatprep.subr.bf16.mxu0 0
    %288 = vmatpush1.bf16.msra.mxu0 0
    %289 = vmatprep.subr.bf16.mxu0 0
    %290 = vmatpush1.bf16.msra.mxu0 0
    %291 = vmatprep.subr.bf16.mxu0 0
    %292 = vmatpush1.bf16.msra.mxu0 0
    %293 = vmatprep.subr.bf16.mxu0 0
    %294 = vmatpush1.bf16.msra.mxu0 0
    %295 = vmatprep.subr.bf16.mxu0 0
    %296 = vmatpush1.bf16.msra.mxu0 0
    %297 = vmatprep.subr.bf16.mxu0 0
    %298 = vmatpush1.bf16.msra.mxu0 0
    %299 = vmatprep.subr.bf16.mxu0 0
    %300 = vmatpush1.bf16.msra.mxu0 0
    %301 = vmatprep.subr.bf16.mxu0 0
    %302 = vmatpush1.bf16.msra.mxu0 0
    %303 = vmatprep.mubr.bf16.mxu0 0
    %304 = vmatmul.mubr.bf16.gmra.mrb[0].mxu0 %v269
    %v305 = vpop.f32.mrb[0].mxu0
    %v306 = vadd.f32 %v242, %v305
    %v307 = vpop.f32.mrb[0].mxu0
    %v308 = vpop.f32.mrb[0].mxu0
    %v309 = vpop.f32.mrb[0].mxu0
    %310 = vdwg.mxu0
    %v311 = vtanh.pop %v306
    %v312 = vmul.f32 %v311, 2.0
    %v313 = vmax.f32 %v306, 0.0
    %v314 = vand.u32 2147483647, %v306
    %v315 = vsub.f32 0.0, %v314
    %v316 = vmul.f32 %v315, 1.442695
    %v317 = vpow.pop %v316
    %v318 = vadd.f32 %v317, 1.0
    %v319 = vlog2.pop %v318
    %v320 = vmul.f32 %v319, 0.6931472
    %v321 = vmul.f32 -0.5, %v317
    %v322 = vadd.f32 %v321, 1.0
    %v323 = vmul.f32 %v322, %v317
    %v324 = vand.u32 2147483647, %v317
    %vm325 = vcmp.lt.f32.partialorder %v324, 0.0004427343
    %v326 = vsel %vm325, %v323, %v320
    %v327 = vadd.f32 %v313, %v326
    %v328 = vadd.f32 %v327, 1e-06
    %v329 = vmax.f32 %v328, 1e-06
    %v330 = vmin.f32 %v329, 1.0
    %v331 = vlaneseq
    %v332 = vand.u32 %v331, 127
    %vm333 = vcmp.lt.s32.totalorder %v332, 8
    %v334 = vsel %vm333, %v312, %v330
    %335 = vst [vmem:[#allocation10] sm:$0xff] %v334
    // Predicated region
    $region46: #{tpu_custom_call.1} parent=1 // pred_check
      _
    $region47: #{tpu_custom_call.1} parent=1 // pred_check_branch
      %337 = sbr.rel (0) target = $region49
    $region48: #{tpu_custom_call.1} parent=1 // pred_region
      %s339 = ssub.s32 128, 128
      %340 = vsyncadd [#allocation4], %s339
      %s342 = sshll.u32 [#allocation10], 4
      %s343 = int_to_ptr.vmem [resolvable:$true] %s342
      %345 = dma.vmem_to_hbm [thread:$0]  %s343, 128, %s7, [#allocation4]
    $region49: #{tpu_custom_call.1} parent=1 // pred_fallthru
      _
    // Predicated region
    $region50: #{tpu_custom_call.1} parent=1 // pred_check
      _
    $region51: #{tpu_custom_call.1} parent=1 // pred_check_branch
      %347 = sbr.rel (0) target = $region53
    $region52: #{tpu_custom_call.1} parent=1 // pred_region
      %348 = dma.done [#allocation4], 128
    $region53: #{tpu_custom_call.1} parent=1 // pred_fallthru
      _
    %349 = vsyncpa [#allocation3], 1
    %350 = vsyncpa [#allocation6], 1
    %351 = vsyncpa [#allocation9], 1
    %352 = vsyncpa [#allocation4], 1

</llo_original>
